<compile_context>
chip_gen: v5e
topology: v5e:2x2
jax: 0.10.0
libtpu: 0.0.40
codegen_flags: <defaults>
</compile_context>

<pallas_src>
import functools

import jax
import jax.numpy as jnp
from jax.experimental import pallas as pl
from jax.experimental.pallas import tpu as pltpu

LANE = 128


def _round_up(x, m):
    return pl.cdiv(x, m) * m


def _default_grid_steps():
    """2 parallel grid steps on 2-TensorCore chips (v7x), else 1."""
    try:
        kind = str(getattr(jax.devices()[0], "device_kind", "")).lower()
    except Exception:
        kind = ""
    return 2 if ("v7" in kind or "7x" in kind) else 1


def policy_kernel(x_ref, w1_ref, b1_ref, w2_ref, b2_ref, wm_ref, bm_ref,
                  mean_ref):
    x = x_ref[...]                                               # (bt, S)

    # fc1 + relu  (f32 MXU accumulation; padded hidden cols have zero
    # weights/bias so they stay exactly zero through the ReLU)
    h1 = jnp.dot(x, w1_ref[...], preferred_element_type=jnp.float32)
    h1 = jnp.maximum(h1 + b1_ref[...], 0.0)                      # (bt, H_pad)

    # fc2 + relu  (operands cast back to param dtype so bf16 params hit the
    # MXU at native rate; no-op cast for f32 params)
    h2 = jnp.dot(h1.astype(w2_ref.dtype), w2_ref[...],
                 preferred_element_type=jnp.float32)
    h2 = jnp.maximum(h2 + b2_ref[...], 0.0)                      # (bt, H_pad)

    # mean head -> lane-dense padded output slab
    mean_ref[...] = (jnp.dot(h2.astype(wm_ref.dtype), wm_ref[...],
                             preferred_element_type=jnp.float32)
                     + bm_ref[...])                              # (bt, A_pad)


def init_params(key, state_dim, action_dim, hidden_size=64):
    """Deterministic synthetic init; same shapes as the PyTorch module."""
    k1, k2, k3, k4, k5, k6 = jax.random.split(key, 6)
    scale = 0.1
    w1 = scale * jax.random.normal(k1, (state_dim, hidden_size), jnp.float32)
    b1 = scale * jax.random.normal(k2, (hidden_size,), jnp.float32)
    w2 = scale * jax.random.normal(k3, (hidden_size, hidden_size), jnp.float32)
    b2 = scale * jax.random.normal(k4, (hidden_size,), jnp.float32)
    wm = scale * jax.random.normal(k5, (hidden_size, action_dim), jnp.float32)
    bm = scale * jax.random.normal(k6, (action_dim,), jnp.float32)
    log_std = jnp.zeros((action_dim,), jnp.float32)  # nn.Parameter(zeros(A))
    return (w1, b1, w2, b2, wm, bm, log_std)


def prepare_params(params, operand_dtype=jnp.float32):
    """One-time (per parameter update) padding/casting of the static params.
    Hidden/action dims are zero-padded to 128 so every matmul output and the
    final store are lane-dense; biases stay f32 (f32 bias-add/ReLU on VPU)."""
    w1, b1, w2, b2, wm, bm, log_std = params
    S, H = w1.shape
    A = wm.shape[1]
    H_pad = _round_up(H, LANE)
    A_pad = _round_up(A, LANE)

    w1p = jnp.pad(w1, ((0, 0), (0, H_pad - H))).astype(operand_dtype)
    b1p = jnp.pad(b1, (0, H_pad - H)).reshape(1, H_pad).astype(jnp.float32)
    w2p = jnp.pad(w2, ((0, H_pad - H), (0, H_pad - H))).astype(operand_dtype)
    b2p = jnp.pad(b2, (0, H_pad - H)).reshape(1, H_pad).astype(jnp.float32)
    wmp = jnp.pad(wm, ((0, H_pad - H), (0, A_pad - A))).astype(operand_dtype)
    bmp = jnp.pad(bm, (0, A_pad - A)).reshape(1, A_pad).astype(jnp.float32)
    return (w1p, b1p, w2p, b2p, wmp, bmp, log_std)


@functools.partial(jax.jit, static_argnames=("grid_steps",))
def policy_forward(state, prepared, *, grid_steps=1):
    """state: (B, state_dim) f32, prepared: output of prepare_params().
    Returns (mean_pad (B, 128) f32, std (A,) f32). mean_pad[:, :action_dim]
    is the policy mean; the lane-padding columns are exact zeros and the
    consumer slices them away (no extra HBM pass inside this forward)."""
    w1p, b1p, w2p, b2p, wmp, bmp, log_std = prepared
    B, S = state.shape
    H_pad = w1p.shape[1]
    A_pad = wmp.shape[1]

    x = state.astype(w1p.dtype)      # no-op for f32 params, cast for bf16

    # One grid step per TensorCore (1 on v5e/v6e, 2 on v7x); 8-row sublanes.
    bt = _round_up(pl.cdiv(B, max(1, grid_steps)), 8)
    grid = (pl.cdiv(B, bt),)

    itemsize = jnp.dtype(w1p.dtype).itemsize
    weight_elems = S * H_pad + H_pad * H_pad + H_pad * A_pad
    cost = pl.CostEstimate(
        flops=2 * B * weight_elems,
        transcendentals=0,
        bytes_accessed=(B * S * itemsize            # x
                        + weight_elems * itemsize   # weights
                        + (2 * H_pad + A_pad) * 4   # biases (f32)
                        + B * A_pad * 4))           # mean slab (f32)

    mean_pad = pl.pallas_call(
        policy_kernel,
        out_shape=jax.ShapeDtypeStruct((B, A_pad), jnp.float32),
        grid_spec=pltpu.PrefetchScalarGridSpec(
            num_scalar_prefetch=0,
            grid=grid,
            in_specs=[
                pl.BlockSpec((bt, S), lambda i: (i, 0)),         # state tile
                pl.BlockSpec((S, H_pad), lambda i: (0, 0)),      # w1
                pl.BlockSpec((1, H_pad), lambda i: (0, 0)),      # b1
                pl.BlockSpec((H_pad, H_pad), lambda i: (0, 0)),  # w2
                pl.BlockSpec((1, H_pad), lambda i: (0, 0)),      # b2
                pl.BlockSpec((H_pad, A_pad), lambda i: (0, 0)),  # wm
                pl.BlockSpec((1, A_pad), lambda i: (0, 0)),      # bm
            ],
            out_specs=pl.BlockSpec((bt, A_pad), lambda i: (i, 0)),
        ),
        compiler_params=pltpu.CompilerParams(
            dimension_semantics=("parallel",)),                  # v7x: 2 TCs
        cost_estimate=cost,
    )(x, w1p, b1p, w2p, b2p, wmp, bmp)

    # std = exp(log_std) is batch-independent (A scalars): hoisted out of the
    # kernel (see header comment).
    std = jnp.exp(log_std)
    return mean_pad, std


if __name__ == "__main__":
    key = jax.random.PRNGKey(0)
    k_state, k_params = jax.random.split(key)

    # Batched policy evaluation (amortizes launch/DMA overhead).
    B, STATE_DIM, ACTION_DIM, HIDDEN = 256, 16, 4, 64
    state = jax.random.normal(k_state, (B, STATE_DIM), jnp.float32)
    params = init_params(k_params, STATE_DIM, ACTION_DIM, HIDDEN)

    grid_steps = _default_grid_steps()   # 2 on v7x (2 TCs), else 1

    # Pure-JAX reference (same math as the PyTorch forward).
    w1, b1, w2, b2, wm, bm, log_std = params
    h1 = jnp.maximum(state @ w1 + b1, 0.0)
    h2 = jnp.maximum(h1 @ w2 + b2, 0.0)
    mean_ref = h2 @ wm + bm
    std_ref = jnp.exp(log_std)

    # --- f32 operands: strict check -----------------------------------------
    prepared_f32 = prepare_params(params, jnp.float32)   # once, outside jit
    mean_pad, std = policy_forward(state, prepared_f32, grid_steps=grid_steps)
    jax.block_until_ready((mean_pad, std))
    mean = mean_pad[:, :ACTION_DIM]                       # consumer-side slice
    assert mean.shape == (B, ACTION_DIM) and std.shape == (ACTION_DIM,)
    assert jnp.allclose(mean, mean_ref, atol=1e-3, rtol=1e-3), "mean mismatch (f32)"
    assert jnp.allclose(std, std_ref, atol=1e-6), "std mismatch"

    # --- bf16 operands (f32 accumulation): halves DMA bytes, loose check ----
    prepared_bf16 = prepare_params(params, jnp.bfloat16)
    mean_pad16, std16 = policy_forward(state, prepared_bf16,
                                       grid_steps=grid_steps)
    jax.block_until_ready((mean_pad16, std16))
    mean16 = mean_pad16[:, :ACTION_DIM]
    assert jnp.allclose(mean16, mean_ref, atol=5e-2, rtol=5e-2), \
        "mean mismatch (bf16)"

    print("KERNEL_OK")
</pallas_src>

<mosaic_0001>
module attributes {stable_mosaic.version = 11 : i64} {
  func.func @policy_kernel(%arg0: i32, %arg1: memref<256x16xf32, #tpu.memory_space<vmem>>, %arg2: memref<16x128xf32, #tpu.memory_space<vmem>>, %arg3: memref<1x128xf32, #tpu.memory_space<vmem>>, %arg4: memref<128x128xf32, #tpu.memory_space<vmem>>, %arg5: memref<1x128xf32, #tpu.memory_space<vmem>>, %arg6: memref<128x128xf32, #tpu.memory_space<vmem>>, %arg7: memref<1x128xf32, #tpu.memory_space<vmem>>, %arg8: memref<256x128xf32, #tpu.memory_space<vmem>>) attributes {dimension_semantics = [#tpu.dimension_semantics<parallel>], iteration_bounds = array<i64: 1>, scalar_prefetch = 0 : i64, scratch_operands = 0 : i64, tpu.core_type = #tpu.core_type<tc>, window_params = [{transform_indices = @transform_0, window_bounds = array<i64: 256, 16>}, {pipeline_mode = #tpu.pipeline_mode<synchronous>, transform_indices = @transform_1, window_bounds = array<i64: 16, 128>}, {pipeline_mode = #tpu.pipeline_mode<synchronous>, transform_indices = @transform_2, window_bounds = array<i64: 1, 128>}, {pipeline_mode = #tpu.pipeline_mode<synchronous>, transform_indices = @transform_3, window_bounds = array<i64: 128, 128>}, {pipeline_mode = #tpu.pipeline_mode<synchronous>, transform_indices = @transform_4, window_bounds = array<i64: 1, 128>}, {pipeline_mode = #tpu.pipeline_mode<synchronous>, transform_indices = @transform_5, window_bounds = array<i64: 128, 128>}, {pipeline_mode = #tpu.pipeline_mode<synchronous>, transform_indices = @transform_6, window_bounds = array<i64: 1, 128>}, {transform_indices = @transform_7, window_bounds = array<i64: 256, 128>}]} {
    %c0 = arith.constant 0 : index
    %c0_0 = arith.constant 0 : index
    %0 = vector.load %arg1[%c0, %c0_0] : memref<256x16xf32, #tpu.memory_space<vmem>>, vector<256x16xf32>
    %c0_1 = arith.constant 0 : index
    %c0_2 = arith.constant 0 : index
    %1 = vector.load %arg2[%c0_1, %c0_2] : memref<16x128xf32, #tpu.memory_space<vmem>>, vector<16x128xf32>
    %cst = arith.constant dense<0.000000e+00> : vector<256x128xf32>
    %2 = tpu.matmul %0, %1, %cst {dimension_numbers = #tpu.dot_dimension_numbers<[1], [0], [0], [1], [0, 0, 1, 1], [], []>} : vector<256x16xf32>, vector<16x128xf32>, vector<256x128xf32> -> vector<256x128xf32>
    %c0_3 = arith.constant 0 : index
    %c0_4 = arith.constant 0 : index
    %3 = vector.load %arg3[%c0_3, %c0_4] : memref<1x128xf32, #tpu.memory_space<vmem>>, vector<1x128xf32>
    %4 = vector.broadcast %3 : vector<1x128xf32> to vector<256x128xf32>
    %5 = arith.addf %2, %4 : vector<256x128xf32>
    %cst_5 = arith.constant 0.000000e+00 : f32
    %6 = vector.broadcast %cst_5 : f32 to vector<256x128xf32>
    %7 = arith.maximumf %5, %6 : vector<256x128xf32>
    %c0_6 = arith.constant 0 : index
    %c0_7 = arith.constant 0 : index
    %8 = vector.load %arg4[%c0_6, %c0_7] : memref<128x128xf32, #tpu.memory_space<vmem>>, vector<128x128xf32>
    %cst_8 = arith.constant dense<0.000000e+00> : vector<256x128xf32>
    %9 = tpu.matmul %7, %8, %cst_8 {dimension_numbers = #tpu.dot_dimension_numbers<[1], [0], [0], [1], [0, 0, 1, 1], [], []>} : vector<256x128xf32>, vector<128x128xf32>, vector<256x128xf32> -> vector<256x128xf32>
    %c0_9 = arith.constant 0 : index
    %c0_10 = arith.constant 0 : index
    %10 = vector.load %arg5[%c0_9, %c0_10] : memref<1x128xf32, #tpu.memory_space<vmem>>, vector<1x128xf32>
    %11 = vector.broadcast %10 : vector<1x128xf32> to vector<256x128xf32>
    %12 = arith.addf %9, %11 : vector<256x128xf32>
    %cst_11 = arith.constant 0.000000e+00 : f32
    %13 = vector.broadcast %cst_11 : f32 to vector<256x128xf32>
    %14 = arith.maximumf %12, %13 : vector<256x128xf32>
    %c0_12 = arith.constant 0 : index
    %c0_13 = arith.constant 0 : index
    %15 = vector.load %arg6[%c0_12, %c0_13] : memref<128x128xf32, #tpu.memory_space<vmem>>, vector<128x128xf32>
    %cst_14 = arith.constant dense<0.000000e+00> : vector<256x128xf32>
    %16 = tpu.matmul %14, %15, %cst_14 {dimension_numbers = #tpu.dot_dimension_numbers<[1], [0], [0], [1], [0, 0, 1, 1], [], []>} : vector<256x128xf32>, vector<128x128xf32>, vector<256x128xf32> -> vector<256x128xf32>
    %c0_15 = arith.constant 0 : index
    %c0_16 = arith.constant 0 : index
    %17 = vector.load %arg7[%c0_15, %c0_16] : memref<1x128xf32, #tpu.memory_space<vmem>>, vector<1x128xf32>
    %18 = vector.broadcast %17 : vector<1x128xf32> to vector<256x128xf32>
    %19 = arith.addf %16, %18 : vector<256x128xf32>
    %c0_17 = arith.constant 0 : index
    %c0_18 = arith.constant 0 : index
    %20 = vector.load %arg8[%c0_17, %c0_18] : memref<256x128xf32, #tpu.memory_space<vmem>>, vector<256x128xf32>
    tpu.vector_store %arg8[%c0_17, %c0_18], %19 {strides = array<i32>} : memref<256x128xf32, #tpu.memory_space<vmem>>, vector<256x128xf32>,
    return
  }
  func.func @transform_0(%arg0: i32) -> (i32, i32) {
    %c0_i32 = arith.constant 0 : i32
    %c0_i32_0 = arith.constant 0 : i32
    return %arg0, %c0_i32 : i32, i32
  }
  func.func @transform_1(%arg0: i32) -> (i32, i32) {
    %c0_i32 = arith.constant 0 : i32
    %c0_i32_0 = arith.constant 0 : i32
    %c0_i32_1 = arith.constant 0 : i32
    return %c0_i32, %c0_i32_0 : i32, i32
  }
  func.func @transform_2(%arg0: i32) -> (i32, i32) {
    %c0_i32 = arith.constant 0 : i32
    %c0_i32_0 = arith.constant 0 : i32
    %c0_i32_1 = arith.constant 0 : i32
    return %c0_i32, %c0_i32_0 : i32, i32
  }
  func.func @transform_3(%arg0: i32) -> (i32, i32) {
    %c0_i32 = arith.constant 0 : i32
    %c0_i32_0 = arith.constant 0 : i32
    %c0_i32_1 = arith.constant 0 : i32
    return %c0_i32, %c0_i32_0 : i32, i32
  }
  func.func @transform_4(%arg0: i32) -> (i32, i32) {
    %c0_i32 = arith.constant 0 : i32
    %c0_i32_0 = arith.constant 0 : i32
    %c0_i32_1 = arith.constant 0 : i32
    return %c0_i32, %c0_i32_0 : i32, i32
  }
  func.func @transform_5(%arg0: i32) -> (i32, i32) {
    %c0_i32 = arith.constant 0 : i32
    %c0_i32_0 = arith.constant 0 : i32
    %c0_i32_1 = arith.constant 0 : i32
    return %c0_i32, %c0_i32_0 : i32, i32
  }
  func.func @transform_6(%arg0: i32) -> (i32, i32) {
    %c0_i32 = arith.constant 0 : i32
    %c0_i32_0 = arith.constant 0 : i32
    %c0_i32_1 = arith.constant 0 : i32
    return %c0_i32, %c0_i32_0 : i32, i32
  }
  func.func @transform_7(%arg0: i32) -> (i32, i32) {
    %c0_i32 = arith.constant 0 : i32
    %c0_i32_0 = arith.constant 0 : i32
    return %arg0, %c0_i32 : i32, i32
  }
}

</mosaic_0001>

<llo_original>
// kernel: policy_forward.1
$region0: #{policy_forward.1}
  #allocation0 [shape = 'u32[]', space=smem, size = 0x4, offset = 0x4, fixed_abs, tag = 'smem constant byte address 0x4 - core index']
  #allocation1 [shape = 'u32[72,128]{1,0:T(1,128)}', space=vmem, size = 0x9000, scoped, tag = 'internal scratch']
  %s0 = inlined_call_operand.vmem [shape: f32[256,16], index: 0, kind: input, shape index: {}]
  %s1 = inlined_call_operand.vmem [shape: f32[16,128], index: 1, kind: input, shape index: {}]
  %s2 = inlined_call_operand.vmem [shape: f32[1,128], index: 2, kind: input, shape index: {}]
  %s3 = inlined_call_operand.vmem [shape: f32[128,128], index: 3, kind: input, shape index: {}]
  %s4 = inlined_call_operand.vmem [shape: f32[1,128], index: 4, kind: input, shape index: {}]
  %s5 = inlined_call_operand.vmem [shape: f32[128,128], index: 5, kind: input, shape index: {}]
  %s6 = inlined_call_operand.vmem [shape: f32[1,128], index: 6, kind: input, shape index: {}]
  %s7 = inlined_call_operand.hbm [shape: f32[256,128], index: 7, kind: output, shape index: {}]
  %s8 = sld [smem:[#allocation0]]
  $region38: #{policy_forward.1} parent=0
    _
  %s10 = ssub.s32 1, %s8
  %s11 = scalar_select 0, %s10, %s8
  $region1: #{policy_forward.1} parent=0
    #allocation2 [shape = 'u8[131072]{0}', space=vmem, size = 0x20000, scoped, tag = 'output window, operand 0, single buffered']
    #allocation3 [shape = 's32[1]{0}', space=sflag, size = 0x4, scoped, tag = 'scoped memory for policy_forward.1']
    %12 = vsyncpa [#allocation3], 0
    // Predicated region
    $region2: #{policy_forward.1} parent=1 // pred_check
      _
    $region3: #{policy_forward.1} parent=1 // pred_check_branch
      %14 = sbr.rel (0) target = $region5
    $region4: #{policy_forward.1} parent=1 // pred_region
      _
    $region5: #{policy_forward.1} parent=1 // pred_fallthru
      _
    // Predicated region
    $region6: #{policy_forward.1} parent=1 // pred_check
      _
    $region7: #{policy_forward.1} parent=1 // pred_check_branch
      %16 = sbr.rel (0) target = $region9
    $region8: #{policy_forward.1} parent=1 // pred_region
      _
    $region9: #{policy_forward.1} parent=1 // pred_fallthru
      _
    // Predicated region
    $region10: #{policy_forward.1} parent=1 // pred_check
      _
    $region11: #{policy_forward.1} parent=1 // pred_check_branch
      %18 = sbr.rel (0) target = $region13
    $region12: #{policy_forward.1} parent=1 // pred_region
      _
    $region13: #{policy_forward.1} parent=1 // pred_fallthru
      _
    // Predicated region
    $region14: #{policy_forward.1} parent=1 // pred_check
      _
    $region15: #{policy_forward.1} parent=1 // pred_check_branch
      %20 = sbr.rel (0) target = $region17
    $region16: #{policy_forward.1} parent=1 // pred_region
      _
    $region17: #{policy_forward.1} parent=1 // pred_fallthru
      _
    // Predicated region
    $region18: #{policy_forward.1} parent=1 // pred_check
      _
    $region19: #{policy_forward.1} parent=1 // pred_check_branch
      %22 = sbr.rel (0) target = $region21
    $region20: #{policy_forward.1} parent=1 // pred_region
      _
    $region21: #{policy_forward.1} parent=1 // pred_fallthru
      _
    // Predicated region
    $region22: #{policy_forward.1} parent=1 // pred_check
      _
    $region23: #{policy_forward.1} parent=1 // pred_check_branch
      %24 = sbr.rel (0) target = $region25
    $region24: #{policy_forward.1} parent=1 // pred_region
      _
    $region25: #{policy_forward.1} parent=1 // pred_fallthru
      _
    // Predicated region
    $region26: #{policy_forward.1} parent=1 // pred_check
      _
    $region27: #{policy_forward.1} parent=1 // pred_check_branch
      %26 = sbr.rel (0) target = $region29
    $region28: #{policy_forward.1} parent=1 // pred_region
      _
    $region29: #{policy_forward.1} parent=1 // pred_fallthru
      _
    %v27 = vld [vmem:[%s0] sm:$0xff]
    %v28 = vld [vmem:[%s0 + $0x8] sm:$0xff]
    %v29 = vld [vmem:[%s0 + $0x10] sm:$0xff]
    %v30 = vld [vmem:[%s0 + $0x18] sm:$0xff]
    %v31 = vld [vmem:[%s0 + $0x20] sm:$0xff]
    %v32 = vld [vmem:[%s0 + $0x28] sm:$0xff]
    %v33 = vld [vmem:[%s0 + $0x30] sm:$0xff]
    %v34 = vld [vmem:[%s0 + $0x38] sm:$0xff]
    %v35 = vld [vmem:[%s0 + $0x40] sm:$0xff]
    %v36 = vld [vmem:[%s0 + $0x48] sm:$0xff]
    %v37 = vld [vmem:[%s0 + $0x50] sm:$0xff]
    %v38 = vld [vmem:[%s0 + $0x58] sm:$0xff]
    %v39 = vld [vmem:[%s0 + $0x60] sm:$0xff]
    %v40 = vld [vmem:[%s0 + $0x68] sm:$0xff]
    %v41 = vld [vmem:[%s0 + $0x70] sm:$0xff]
    %v42 = vld [vmem:[%s0 + $0x78] sm:$0xff]
    %v43 = vld [vmem:[%s0 + $0x80] sm:$0xff]
    %v44 = vld [vmem:[%s0 + $0x88] sm:$0xff]
    %v45 = vld [vmem:[%s0 + $0x90] sm:$0xff]
    %v46 = vld [vmem:[%s0 + $0x98] sm:$0xff]
    %v47 = vld [vmem:[%s0 + $0xa0] sm:$0xff]
    %v48 = vld [vmem:[%s0 + $0xa8] sm:$0xff]
    %v49 = vld [vmem:[%s0 + $0xb0] sm:$0xff]
    %v50 = vld [vmem:[%s0 + $0xb8] sm:$0xff]
    %v51 = vld [vmem:[%s0 + $0xc0] sm:$0xff]
    %v52 = vld [vmem:[%s0 + $0xc8] sm:$0xff]
    %v53 = vld [vmem:[%s0 + $0xd0] sm:$0xff]
    %v54 = vld [vmem:[%s0 + $0xd8] sm:$0xff]
    %v55 = vld [vmem:[%s0 + $0xe0] sm:$0xff]
    %v56 = vld [vmem:[%s0 + $0xe8] sm:$0xff]
    %v57 = vld [vmem:[%s0 + $0xf0] sm:$0xff]
    %v58 = vld [vmem:[%s0 + $0xf8] sm:$0xff]
    %v59 = vld [vmem:[%s1] sm:$0xff]
    %v60 = vld [vmem:[%s1 + $0x8] sm:$0xff]
    %v61 = vld [vmem:[%s2] sm:$0x1]
    %v63 = vperm.slane %v61, 0
    %vm65 = vcmask 130048
    %v67 = vsel %vm65, %v27, 0
    %v70 = vsel %vm65, %v28, 0
    %v73 = vsel %vm65, %v29, 0
    %v76 = vsel %vm65, %v30, 0
    %v79 = vsel %vm65, %v31, 0
    %v82 = vsel %vm65, %v32, 0
    %v85 = vsel %vm65, %v33, 0
    %v88 = vsel %vm65, %v34, 0
    %v91 = vsel %vm65, %v35, 0
    %v94 = vsel %vm65, %v36, 0
    %v97 = vsel %vm65, %v37, 0
    %v100 = vsel %vm65, %v38, 0
    %v103 = vsel %vm65, %v39, 0
    %v106 = vsel %vm65, %v40, 0
    %v109 = vsel %vm65, %v41, 0
    %v112 = vsel %vm65, %v42, 0
    %v115 = vsel %vm65, %v43, 0
    %v118 = vsel %vm65, %v44, 0
    %v121 = vsel %vm65, %v45, 0
    %v124 = vsel %vm65, %v46, 0
    %v127 = vsel %vm65, %v47, 0
    %v130 = vsel %vm65, %v48, 0
    %v133 = vsel %vm65, %v49, 0
    %v136 = vsel %vm65, %v50, 0
    %v139 = vsel %vm65, %v51, 0
    %v142 = vsel %vm65, %v52, 0
    %v145 = vsel %vm65, %v53, 0
    %v148 = vsel %vm65, %v54, 0
    %v151 = vsel %vm65, %v55, 0
    %v154 = vsel %vm65, %v56, 0
    %v157 = vsel %vm65, %v57, 0
    %v160 = vsel %vm65, %v58, 0
    %162 = vmatpush.msra.mxu0 0.0
    %163 = vmatpush.msra.mxu0 0.0
    %164 = vmatpush.msra.mxu0 0.0
    %165 = vmatpush.msra.mxu0 0.0
    %166 = vmatpush.msra.mxu0 0.0
    %167 = vmatpush.msra.mxu0 0.0
    %168 = vmatpush.msra.mxu0 0.0
    %169 = vmatpush.msra.mxu0 0.0
    %170 = vmatpush.msra.mxu0 0.0
    %171 = vmatpush.msra.mxu0 0.0
    %172 = vmatpush.msra.mxu0 0.0
    %173 = vmatpush.msra.mxu0 0.0
    %174 = vmatpush.msra.mxu0 0.0
    %175 = vmatpush.msra.mxu0 0.0
    %176 = vmatpush.msra.mxu0 %v60
    %177 = vmatpush.msra.mxu0 %v59
    %178 = vmatmul.f32.gmra.mxu0 %v67
    %v179 = vpop.f32.mrf.mxu0
    %v180 = vadd.f32 %v63, %v179
    %181 = vmatmul.f32.gmra.mxu0 %v70
    %v182 = vpop.f32.mrf.mxu0
    %v183 = vadd.f32 %v63, %v182
    %184 = vmatmul.f32.gmra.mxu0 %v73
    %v185 = vpop.f32.mrf.mxu0
    %v186 = vadd.f32 %v63, %v185
    %187 = vmatmul.f32.gmra.mxu0 %v76
    %v188 = vpop.f32.mrf.mxu0
    %v189 = vadd.f32 %v63, %v188
    %190 = vmatmul.f32.gmra.mxu0 %v79
    %v191 = vpop.f32.mrf.mxu0
    %v192 = vadd.f32 %v63, %v191
    %193 = vmatmul.f32.gmra.mxu0 %v82
    %v194 = vpop.f32.mrf.mxu0
    %v195 = vadd.f32 %v63, %v194
    %196 = vmatmul.f32.gmra.mxu0 %v85
    %v197 = vpop.f32.mrf.mxu0
    %v198 = vadd.f32 %v63, %v197
    %199 = vmatmul.f32.gmra.mxu0 %v88
    %v200 = vpop.f32.mrf.mxu0
    %v201 = vadd.f32 %v63, %v200
    %202 = vmatmul.f32.gmra.mxu0 %v91
    %v203 = vpop.f32.mrf.mxu0
    %v204 = vadd.f32 %v63, %v203
    %205 = vmatmul.f32.gmra.mxu0 %v94
    %v206 = vpop.f32.mrf.mxu0
    %v207 = vadd.f32 %v63, %v206
    %208 = vmatmul.f32.gmra.mxu0 %v97
    %v209 = vpop.f32.mrf.mxu0
    %v210 = vadd.f32 %v63, %v209
    %211 = vmatmul.f32.gmra.mxu0 %v100
    %v212 = vpop.f32.mrf.mxu0
    %v213 = vadd.f32 %v63, %v212
    %214 = vmatmul.f32.gmra.mxu0 %v103
    %v215 = vpop.f32.mrf.mxu0
    %v216 = vadd.f32 %v63, %v215
    %217 = vmatmul.f32.gmra.mxu0 %v106
    %v218 = vpop.f32.mrf.mxu0
    %v219 = vadd.f32 %v63, %v218
    %220 = vmatmul.f32.gmra.mxu0 %v109
    %v221 = vpop.f32.mrf.mxu0
    %v222 = vadd.f32 %v63, %v221
    %223 = vmatmul.f32.gmra.mxu0 %v112
    %v224 = vpop.f32.mrf.mxu0
    %v225 = vadd.f32 %v63, %v224
    %226 = vmatmul.f32.gmra.mxu0 %v115
    %v227 = vpop.f32.mrf.mxu0
    %v228 = vadd.f32 %v63, %v227
    %229 = vmatmul.f32.gmra.mxu0 %v118
    %v230 = vpop.f32.mrf.mxu0
    %v231 = vadd.f32 %v63, %v230
    %232 = vmatmul.f32.gmra.mxu0 %v121
    %v233 = vpop.f32.mrf.mxu0
    %v234 = vadd.f32 %v63, %v233
    %235 = vmatmul.f32.gmra.mxu0 %v124
    %v236 = vpop.f32.mrf.mxu0
    %v237 = vadd.f32 %v63, %v236
    %238 = vmatmul.f32.gmra.mxu0 %v127
    %v239 = vpop.f32.mrf.mxu0
    %v240 = vadd.f32 %v63, %v239
    %241 = vmatmul.f32.gmra.mxu0 %v130
    %v242 = vpop.f32.mrf.mxu0
    %v243 = vadd.f32 %v63, %v242
    %244 = vmatmul.f32.gmra.mxu0 %v133
    %v245 = vpop.f32.mrf.mxu0
    %v246 = vadd.f32 %v63, %v245
    %247 = vmatmul.f32.gmra.mxu0 %v136
    %v248 = vpop.f32.mrf.mxu0
    %v249 = vadd.f32 %v63, %v248
    %250 = vmatmul.f32.gmra.mxu0 %v139
    %v251 = vpop.f32.mrf.mxu0
    %v252 = vadd.f32 %v63, %v251
    %253 = vmatmul.f32.gmra.mxu0 %v142
    %v254 = vpop.f32.mrf.mxu0
    %v255 = vadd.f32 %v63, %v254
    %256 = vmatmul.f32.gmra.mxu0 %v145
    %v257 = vpop.f32.mrf.mxu0
    %v258 = vadd.f32 %v63, %v257
    %259 = vmatmul.f32.gmra.mxu0 %v148
    %v260 = vpop.f32.mrf.mxu0
    %v261 = vadd.f32 %v63, %v260
    %262 = vmatmul.f32.gmra.mxu0 %v151
    %v263 = vpop.f32.mrf.mxu0
    %v264 = vadd.f32 %v63, %v263
    %265 = vmatmul.f32.gmra.mxu0 %v154
    %v266 = vpop.f32.mrf.mxu0
    %v267 = vadd.f32 %v63, %v266
    %268 = vmatmul.f32.gmra.mxu0 %v157
    %v269 = vpop.f32.mrf.mxu0
    %v270 = vadd.f32 %v63, %v269
    %271 = vmatmul.f32.gmra.mxu0 %v160
    %v272 = vpop.f32.mrf.mxu0
    %v273 = vadd.f32 %v63, %v272
    %274 = vdwg.mxu0
    %v275 = vmax.f32 %v180, 0.0
    %v276 = vmax.f32 %v183, 0.0
    %v277 = vmax.f32 %v186, 0.0
    %v278 = vmax.f32 %v189, 0.0
    %v279 = vmax.f32 %v192, 0.0
    %v280 = vmax.f32 %v195, 0.0
    %v281 = vmax.f32 %v198, 0.0
    %v282 = vmax.f32 %v201, 0.0
    %v283 = vmax.f32 %v204, 0.0
    %v284 = vmax.f32 %v207, 0.0
    %v285 = vmax.f32 %v210, 0.0
    %v286 = vmax.f32 %v213, 0.0
    %v287 = vmax.f32 %v216, 0.0
    %v288 = vmax.f32 %v219, 0.0
    %v289 = vmax.f32 %v222, 0.0
    %v290 = vmax.f32 %v225, 0.0
    %v291 = vmax.f32 %v228, 0.0
    %v292 = vmax.f32 %v231, 0.0
    %v293 = vmax.f32 %v234, 0.0
    %v294 = vmax.f32 %v237, 0.0
    %v295 = vmax.f32 %v240, 0.0
    %v296 = vmax.f32 %v243, 0.0
    %v297 = vmax.f32 %v246, 0.0
    %v298 = vmax.f32 %v249, 0.0
    %v299 = vmax.f32 %v252, 0.0
    %v300 = vmax.f32 %v255, 0.0
    %v301 = vmax.f32 %v258, 0.0
    %v302 = vmax.f32 %v261, 0.0
    %v303 = vmax.f32 %v264, 0.0
    %v304 = vmax.f32 %v267, 0.0
    %v305 = vmax.f32 %v270, 0.0
    %v306 = vmax.f32 %v273, 0.0
    %v307 = vld [vmem:[%s3] sm:$0xff]
    %v308 = vld [vmem:[%s3 + $0x8] sm:$0xff]
    %v309 = vld [vmem:[%s3 + $0x10] sm:$0xff]
    %v310 = vld [vmem:[%s3 + $0x18] sm:$0xff]
    %v311 = vld [vmem:[%s3 + $0x20] sm:$0xff]
    %v312 = vld [vmem:[%s3 + $0x28] sm:$0xff]
    %v313 = vld [vmem:[%s3 + $0x30] sm:$0xff]
    %v314 = vld [vmem:[%s3 + $0x38] sm:$0xff]
    %v315 = vld [vmem:[%s3 + $0x40] sm:$0xff]
    %v316 = vld [vmem:[%s3 + $0x48] sm:$0xff]
    %v317 = vld [vmem:[%s3 + $0x50] sm:$0xff]
    %v318 = vld [vmem:[%s3 + $0x58] sm:$0xff]
    %v319 = vld [vmem:[%s3 + $0x60] sm:$0xff]
    %v320 = vld [vmem:[%s3 + $0x68] sm:$0xff]
    %v321 = vld [vmem:[%s3 + $0x70] sm:$0xff]
    %v322 = vld [vmem:[%s3 + $0x78] sm:$0xff]
    %v323 = vld [vmem:[%s4] sm:$0x1]
    %v325 = vperm.slane %v323, 0
    %327 = vmatpush.msra.mxu0 %v322
    %328 = vmatpush.msra.mxu0 %v321
    %329 = vmatpush.msra.mxu0 %v320
    %330 = vmatpush.msra.mxu0 %v319
    %331 = vmatpush.msra.mxu0 %v318
    %332 = vmatpush.msra.mxu0 %v317
    %333 = vmatpush.msra.mxu0 %v316
    %334 = vmatpush.msra.mxu0 %v315
    %335 = vmatpush.msra.mxu0 %v314
    %336 = vmatpush.msra.mxu0 %v313
    %337 = vmatpush.msra.mxu0 %v312
    %338 = vmatpush.msra.mxu0 %v311
    %339 = vmatpush.msra.mxu0 %v310
    %340 = vmatpush.msra.mxu0 %v309
    %341 = vmatpush.msra.mxu0 %v308
    %342 = vmatpush.msra.mxu0 %v307
    %343 = vmatmul.f32.gmra.mxu0 %v275
    %v344 = vpop.f32.mrf.mxu0
    %v345 = vadd.f32 %v325, %v344
    %346 = vmatmul.f32.gmra.mxu0 %v276
    %v347 = vpop.f32.mrf.mxu0
    %v348 = vadd.f32 %v325, %v347
    %349 = vmatmul.f32.gmra.mxu0 %v277
    %v350 = vpop.f32.mrf.mxu0
    %v351 = vadd.f32 %v325, %v350
    %352 = vmatmul.f32.gmra.mxu0 %v278
    %v353 = vpop.f32.mrf.mxu0
    %v354 = vadd.f32 %v325, %v353
    %355 = vmatmul.f32.gmra.mxu0 %v279
    %v356 = vpop.f32.mrf.mxu0
    %v357 = vadd.f32 %v325, %v356
    %358 = vmatmul.f32.gmra.mxu0 %v280
    %v359 = vpop.f32.mrf.mxu0
    %v360 = vadd.f32 %v325, %v359
    %361 = vmatmul.f32.gmra.mxu0 %v281
    %v362 = vpop.f32.mrf.mxu0
    %v363 = vadd.f32 %v325, %v362
    %364 = vmatmul.f32.gmra.mxu0 %v282
    %v365 = vpop.f32.mrf.mxu0
    %v366 = vadd.f32 %v325, %v365
    %367 = vmatmul.f32.gmra.mxu0 %v283
    %v368 = vpop.f32.mrf.mxu0
    %v369 = vadd.f32 %v325, %v368
    %370 = vmatmul.f32.gmra.mxu0 %v284
    %v371 = vpop.f32.mrf.mxu0
    %v372 = vadd.f32 %v325, %v371
    %373 = vmatmul.f32.gmra.mxu0 %v285
    %v374 = vpop.f32.mrf.mxu0
    %v375 = vadd.f32 %v325, %v374
    %376 = vmatmul.f32.gmra.mxu0 %v286
    %v377 = vpop.f32.mrf.mxu0
    %v378 = vadd.f32 %v325, %v377
    %379 = vmatmul.f32.gmra.mxu0 %v287
    %v380 = vpop.f32.mrf.mxu0
    %v381 = vadd.f32 %v325, %v380
    %382 = vmatmul.f32.gmra.mxu0 %v288
    %v383 = vpop.f32.mrf.mxu0
    %v384 = vadd.f32 %v325, %v383
    %385 = vmatmul.f32.gmra.mxu0 %v289
    %v386 = vpop.f32.mrf.mxu0
    %v387 = vadd.f32 %v325, %v386
    %388 = vmatmul.f32.gmra.mxu0 %v290
    %v389 = vpop.f32.mrf.mxu0
    %v390 = vadd.f32 %v325, %v389
    %391 = vmatmul.f32.gmra.mxu0 %v291
    %v392 = vpop.f32.mrf.mxu0
    %v393 = vadd.f32 %v325, %v392
    %394 = vmatmul.f32.gmra.mxu0 %v292
    %v395 = vpop.f32.mrf.mxu0
    %v396 = vadd.f32 %v325, %v395
    %397 = vmatmul.f32.gmra.mxu0 %v293
    %v398 = vpop.f32.mrf.mxu0
    %v399 = vadd.f32 %v325, %v398
    %400 = vmatmul.f32.gmra.mxu0 %v294
    %v401 = vpop.f32.mrf.mxu0
    %v402 = vadd.f32 %v325, %v401
    %403 = vmatmul.f32.gmra.mxu0 %v295
    %v404 = vpop.f32.mrf.mxu0
    %v405 = vadd.f32 %v325, %v404
    %406 = vmatmul.f32.gmra.mxu0 %v296
    %v407 = vpop.f32.mrf.mxu0
    %v408 = vadd.f32 %v325, %v407
    %409 = vmatmul.f32.gmra.mxu0 %v297
    %v410 = vpop.f32.mrf.mxu0
    %v411 = vadd.f32 %v325, %v410
    %412 = vmatmul.f32.gmra.mxu0 %v298
    %v413 = vpop.f32.mrf.mxu0
    %v414 = vadd.f32 %v325, %v413
    %415 = vmatmul.f32.gmra.mxu0 %v299
    %v416 = vpop.f32.mrf.mxu0
    %v417 = vadd.f32 %v325, %v416
    %418 = vmatmul.f32.gmra.mxu0 %v300
    %v419 = vpop.f32.mrf.mxu0
    %v420 = vadd.f32 %v325, %v419
    %421 = vmatmul.f32.gmra.mxu0 %v301
    %v422 = vpop.f32.mrf.mxu0
    %v423 = vadd.f32 %v325, %v422
    %424 = vmatmul.f32.gmra.mxu0 %v302
    %v425 = vpop.f32.mrf.mxu0
    %v426 = vadd.f32 %v325, %v425
    %427 = vmatmul.f32.gmra.mxu0 %v303
    %v428 = vpop.f32.mrf.mxu0
    %v429 = vadd.f32 %v325, %v428
    %430 = vmatmul.f32.gmra.mxu0 %v304
    %v431 = vpop.f32.mrf.mxu0
    %v432 = vadd.f32 %v325, %v431
    %433 = vmatmul.f32.gmra.mxu0 %v305
    %v434 = vpop.f32.mrf.mxu0
    %v435 = vadd.f32 %v325, %v434
    %436 = vmatmul.f32.gmra.mxu0 %v306
    %v437 = vpop.f32.mrf.mxu0
    %v438 = vadd.f32 %v325, %v437
    %439 = vdwg.mxu0
    %v440 = vmax.f32 %v345, 0.0
    %v441 = vmax.f32 %v348, 0.0
    %v442 = vmax.f32 %v351, 0.0
    %v443 = vmax.f32 %v354, 0.0
    %v444 = vmax.f32 %v357, 0.0
    %v445 = vmax.f32 %v360, 0.0
    %v446 = vmax.f32 %v363, 0.0
    %v447 = vmax.f32 %v366, 0.0
    %v448 = vmax.f32 %v369, 0.0
    %v449 = vmax.f32 %v372, 0.0
    %v450 = vmax.f32 %v375, 0.0
    %v451 = vmax.f32 %v378, 0.0
    %v452 = vmax.f32 %v381, 0.0
    %v453 = vmax.f32 %v384, 0.0
    %v454 = vmax.f32 %v387, 0.0
    %v455 = vmax.f32 %v390, 0.0
    %v456 = vmax.f32 %v393, 0.0
    %v457 = vmax.f32 %v396, 0.0
    %v458 = vmax.f32 %v399, 0.0
    %v459 = vmax.f32 %v402, 0.0
    %v460 = vmax.f32 %v405, 0.0
    %v461 = vmax.f32 %v408, 0.0
    %v462 = vmax.f32 %v411, 0.0
    %v463 = vmax.f32 %v414, 0.0
    %v464 = vmax.f32 %v417, 0.0
    %v465 = vmax.f32 %v420, 0.0
    %v466 = vmax.f32 %v423, 0.0
    %v467 = vmax.f32 %v426, 0.0
    %v468 = vmax.f32 %v429, 0.0
    %v469 = vmax.f32 %v432, 0.0
    %v470 = vmax.f32 %v435, 0.0
    %v471 = vmax.f32 %v438, 0.0
    %v472 = vld [vmem:[%s5] sm:$0xff]
    %v473 = vld [vmem:[%s5 + $0x8] sm:$0xff]
    %v474 = vld [vmem:[%s5 + $0x10] sm:$0xff]
    %v475 = vld [vmem:[%s5 + $0x18] sm:$0xff]
    %v476 = vld [vmem:[%s5 + $0x20] sm:$0xff]
    %v477 = vld [vmem:[%s5 + $0x28] sm:$0xff]
    %v478 = vld [vmem:[%s5 + $0x30] sm:$0xff]
    %v479 = vld [vmem:[%s5 + $0x38] sm:$0xff]
    %v480 = vld [vmem:[%s5 + $0x40] sm:$0xff]
    %v481 = vld [vmem:[%s5 + $0x48] sm:$0xff]
    %v482 = vld [vmem:[%s5 + $0x50] sm:$0xff]
    %v483 = vld [vmem:[%s5 + $0x58] sm:$0xff]
    %v484 = vld [vmem:[%s5 + $0x60] sm:$0xff]
    %v485 = vld [vmem:[%s5 + $0x68] sm:$0xff]
    %v486 = vld [vmem:[%s5 + $0x70] sm:$0xff]
    %v487 = vld [vmem:[%s5 + $0x78] sm:$0xff]
    %v488 = vld [vmem:[%s6] sm:$0x1]
    %v490 = vperm.slane %v488, 0
    %492 = vmatpush.msra.mxu0 %v487
    %493 = vmatpush.msra.mxu0 %v486
    %494 = vmatpush.msra.mxu0 %v485
    %495 = vmatpush.msra.mxu0 %v484
    %496 = vmatpush.msra.mxu0 %v483
    %497 = vmatpush.msra.mxu0 %v482
    %498 = vmatpush.msra.mxu0 %v481
    %499 = vmatpush.msra.mxu0 %v480
    %500 = vmatpush.msra.mxu0 %v479
    %501 = vmatpush.msra.mxu0 %v478
    %502 = vmatpush.msra.mxu0 %v477
    %503 = vmatpush.msra.mxu0 %v476
    %504 = vmatpush.msra.mxu0 %v475
    %505 = vmatpush.msra.mxu0 %v474
    %506 = vmatpush.msra.mxu0 %v473
    %507 = vmatpush.msra.mxu0 %v472
    %508 = vmatmul.f32.gmra.mxu0 %v440
    %v509 = vpop.f32.mrf.mxu0
    %v510 = vadd.f32 %v490, %v509
    %511 = vmatmul.f32.gmra.mxu0 %v441
    %v512 = vpop.f32.mrf.mxu0
    %v513 = vadd.f32 %v490, %v512
    %514 = vmatmul.f32.gmra.mxu0 %v442
    %v515 = vpop.f32.mrf.mxu0
    %v516 = vadd.f32 %v490, %v515
    %517 = vmatmul.f32.gmra.mxu0 %v443
    %v518 = vpop.f32.mrf.mxu0
    %v519 = vadd.f32 %v490, %v518
    %520 = vmatmul.f32.gmra.mxu0 %v444
    %v521 = vpop.f32.mrf.mxu0
    %v522 = vadd.f32 %v490, %v521
    %523 = vmatmul.f32.gmra.mxu0 %v445
    %v524 = vpop.f32.mrf.mxu0
    %v525 = vadd.f32 %v490, %v524
    %526 = vmatmul.f32.gmra.mxu0 %v446
    %v527 = vpop.f32.mrf.mxu0
    %v528 = vadd.f32 %v490, %v527
    %529 = vmatmul.f32.gmra.mxu0 %v447
    %v530 = vpop.f32.mrf.mxu0
    %v531 = vadd.f32 %v490, %v530
    %532 = vmatmul.f32.gmra.mxu0 %v448
    %v533 = vpop.f32.mrf.mxu0
    %v534 = vadd.f32 %v490, %v533
    %535 = vmatmul.f32.gmra.mxu0 %v449
    %v536 = vpop.f32.mrf.mxu0
    %v537 = vadd.f32 %v490, %v536
    %538 = vmatmul.f32.gmra.mxu0 %v450
    %v539 = vpop.f32.mrf.mxu0
    %v540 = vadd.f32 %v490, %v539
    %541 = vmatmul.f32.gmra.mxu0 %v451
    %v542 = vpop.f32.mrf.mxu0
    %v543 = vadd.f32 %v490, %v542
    %544 = vmatmul.f32.gmra.mxu0 %v452
    %v545 = vpop.f32.mrf.mxu0
    %v546 = vadd.f32 %v490, %v545
    %547 = vmatmul.f32.gmra.mxu0 %v453
    %v548 = vpop.f32.mrf.mxu0
    %v549 = vadd.f32 %v490, %v548
    %550 = vmatmul.f32.gmra.mxu0 %v454
    %v551 = vpop.f32.mrf.mxu0
    %v552 = vadd.f32 %v490, %v551
    %553 = vmatmul.f32.gmra.mxu0 %v455
    %v554 = vpop.f32.mrf.mxu0
    %v555 = vadd.f32 %v490, %v554
    %556 = vmatmul.f32.gmra.mxu0 %v456
    %v557 = vpop.f32.mrf.mxu0
    %v558 = vadd.f32 %v490, %v557
    %559 = vmatmul.f32.gmra.mxu0 %v457
    %v560 = vpop.f32.mrf.mxu0
    %v561 = vadd.f32 %v490, %v560
    %562 = vmatmul.f32.gmra.mxu0 %v458
    %v563 = vpop.f32.mrf.mxu0
    %v564 = vadd.f32 %v490, %v563
    %565 = vmatmul.f32.gmra.mxu0 %v459
    %v566 = vpop.f32.mrf.mxu0
    %v567 = vadd.f32 %v490, %v566
    %568 = vmatmul.f32.gmra.mxu0 %v460
    %v569 = vpop.f32.mrf.mxu0
    %v570 = vadd.f32 %v490, %v569
    %571 = vmatmul.f32.gmra.mxu0 %v461
    %v572 = vpop.f32.mrf.mxu0
    %v573 = vadd.f32 %v490, %v572
    %574 = vmatmul.f32.gmra.mxu0 %v462
    %v575 = vpop.f32.mrf.mxu0
    %v576 = vadd.f32 %v490, %v575
    %577 = vmatmul.f32.gmra.mxu0 %v463
    %v578 = vpop.f32.mrf.mxu0
    %v579 = vadd.f32 %v490, %v578
    %580 = vmatmul.f32.gmra.mxu0 %v464
    %v581 = vpop.f32.mrf.mxu0
    %v582 = vadd.f32 %v490, %v581
    %583 = vmatmul.f32.gmra.mxu0 %v465
    %v584 = vpop.f32.mrf.mxu0
    %v585 = vadd.f32 %v490, %v584
    %586 = vmatmul.f32.gmra.mxu0 %v466
    %v587 = vpop.f32.mrf.mxu0
    %v588 = vadd.f32 %v490, %v587
    %589 = vmatmul.f32.gmra.mxu0 %v467
    %v590 = vpop.f32.mrf.mxu0
    %v591 = vadd.f32 %v490, %v590
    %592 = vmatmul.f32.gmra.mxu0 %v468
    %v593 = vpop.f32.mrf.mxu0
    %v594 = vadd.f32 %v490, %v593
    %595 = vmatmul.f32.gmra.mxu0 %v469
    %v596 = vpop.f32.mrf.mxu0
    %v597 = vadd.f32 %v490, %v596
    %598 = vmatmul.f32.gmra.mxu0 %v470
    %v599 = vpop.f32.mrf.mxu0
    %v600 = vadd.f32 %v490, %v599
    %601 = vmatmul.f32.gmra.mxu0 %v471
    %v602 = vpop.f32.mrf.mxu0
    %v603 = vadd.f32 %v490, %v602
    %604 = vdwg.mxu0
    %605 = vst [vmem:[#allocation2] sm:$0xff] %v510
    %606 = vst [vmem:[#allocation2 + $0x8] sm:$0xff] %v513
    %607 = vst [vmem:[#allocation2 + $0x10] sm:$0xff] %v516
    %608 = vst [vmem:[#allocation2 + $0x18] sm:$0xff] %v519
    %609 = vst [vmem:[#allocation2 + $0x20] sm:$0xff] %v522
    %610 = vst [vmem:[#allocation2 + $0x28] sm:$0xff] %v525
    %611 = vst [vmem:[#allocation2 + $0x30] sm:$0xff] %v528
    %612 = vst [vmem:[#allocation2 + $0x38] sm:$0xff] %v531
    %613 = vst [vmem:[#allocation2 + $0x40] sm:$0xff] %v534
    %614 = vst [vmem:[#allocation2 + $0x48] sm:$0xff] %v537
    %615 = vst [vmem:[#allocation2 + $0x50] sm:$0xff] %v540
    %616 = vst [vmem:[#allocation2 + $0x58] sm:$0xff] %v543
    %617 = vst [vmem:[#allocation2 + $0x60] sm:$0xff] %v546
    %618 = vst [vmem:[#allocation2 + $0x68] sm:$0xff] %v549
    %619 = vst [vmem:[#allocation2 + $0x70] sm:$0xff] %v552
    %620 = vst [vmem:[#allocation2 + $0x78] sm:$0xff] %v555
    %621 = vst [vmem:[#allocation2 + $0x80] sm:$0xff] %v558
    %622 = vst [vmem:[#allocation2 + $0x88] sm:$0xff] %v561
    %623 = vst [vmem:[#allocation2 + $0x90] sm:$0xff] %v564
    %624 = vst [vmem:[#allocation2 + $0x98] sm:$0xff] %v567
    %625 = vst [vmem:[#allocation2 + $0xa0] sm:$0xff] %v570
    %626 = vst [vmem:[#allocation2 + $0xa8] sm:$0xff] %v573
    %627 = vst [vmem:[#allocation2 + $0xb0] sm:$0xff] %v576
    %628 = vst [vmem:[#allocation2 + $0xb8] sm:$0xff] %v579
    %629 = vst [vmem:[#allocation2 + $0xc0] sm:$0xff] %v582
    %630 = vst [vmem:[#allocation2 + $0xc8] sm:$0xff] %v585
    %631 = vst [vmem:[#allocation2 + $0xd0] sm:$0xff] %v588
    %632 = vst [vmem:[#allocation2 + $0xd8] sm:$0xff] %v591
    %633 = vst [vmem:[#allocation2 + $0xe0] sm:$0xff] %v594
    %634 = vst [vmem:[#allocation2 + $0xe8] sm:$0xff] %v597
    %635 = vst [vmem:[#allocation2 + $0xf0] sm:$0xff] %v600
    %636 = vst [vmem:[#allocation2 + $0xf8] sm:$0xff] %v603
    // Predicated region
    $region30: #{policy_forward.1} parent=1 // pred_check
      _
    $region31: #{policy_forward.1} parent=1 // pred_check_branch
      %638 = sbr.rel (0) target = $region33
    $region32: #{policy_forward.1} parent=1 // pred_region
      %640 = vsyncadd [#allocation3], 0
      %s641 = sshll.u32 [#allocation2], 4
      %s642 = int_to_ptr.vmem [resolvable:$true] %s641
      %s643 = sshll.u32 %s7, 4
      %s644 = int_to_ptr.hbm [resolvable:$true] %s643
      %649 = dma.vmem_to_hbm [thread:$0]  %s642, 4096, %s644, [#allocation3], 128, 128, 8
    $region33: #{policy_forward.1} parent=1 // pred_fallthru
      _
    // Predicated region
    $region34: #{policy_forward.1} parent=1 // pred_check
      _
    $region35: #{policy_forward.1} parent=1 // pred_check_branch
      %651 = sbr.rel (0) target = $region37
    $region36: #{policy_forward.1} parent=1 // pred_region
      %653 = dma.done [#allocation3], 4096
    $region37: #{policy_forward.1} parent=1 // pred_fallthru
      _
    %654 = vsyncpa [#allocation3], 1

</llo_original>
